<compile_context>
chip_gen: v7x
topology: tpu7x:2x2x1
jax: 0.10.0
libtpu: 0.0.40
codegen_flags: <defaults>
</compile_context>

<pallas_src>
import jax
import jax.numpy as jnp
from jax.experimental import pallas as pl
from jax.experimental.pallas import tpu as pltpu

EPS = 1e-10
LANES = 128


def _dicetopk_kernel(pred_ref, ann_ref, ce_ref, num_ref):
    """One (batch, pixel-tile) step.

    pred_ref : (1, C, RT, 128) float   logits tile
    ann_ref  : (1, RT, 128)    int32   labels tile (-1 => padding)
    ce_ref   : (1, RT, 128)    f32     per-pixel onehot * log(p2_label + eps)
    num_ref  : (1, 1, 8, 128)  f32     per-tile partial sum of p2_label (dice num)
    """
    C = pred_ref.shape[1]

    # Channel axis is unrolled in Python: every op below is a pure VPU
    # elementwise op on well-shaped (RT, 128) slabs.
    x = [pred_ref[0, c].astype(jnp.float32) for c in range(C)]

    # --- softmax #1 over channels ---
    m1 = x[0]
    for c in range(1, C):
        m1 = jnp.maximum(m1, x[c])
    e1 = [jnp.exp(x[c] - m1) for c in range(C)]
    s1 = e1[0]
    for c in range(1, C):
        s1 = s1 + e1[c]
    r1 = pl.reciprocal(s1)                     # exact (approx too coarse for 1e-5 tol)
    p1 = [e1[c] * r1 for c in range(C)]

    # --- softmax #2 over channels (double softmax, per the PyTorch module) ---
    m2 = p1[0]
    for c in range(1, C):
        m2 = jnp.maximum(m2, p1[c])
    e2 = [jnp.exp(p1[c] - m2) for c in range(C)]
    s2 = e2[0]
    for c in range(1, C):
        s2 = s2 + e2[c]

    # --- gather the label channel via masked select (no full p2 needed) ---
    labels = ann_ref[0]                        # (RT, 128) int32, -1 for padding
    zero = jnp.zeros_like(s2)
    e2_lab = zero
    valid = zero
    for c in range(C):
        hit = labels == c
        e2_lab = jnp.where(hit, e2[c], e2_lab)
        valid = jnp.where(hit, 1.0, valid)     # 1 if label in [0, C), else 0

    p2_lab = e2_lab * pl.reciprocal(s2)        # p2 at the label channel (0 if padded)

    # Per-pixel top-k term: only the label channel of onehot*log(p2+eps) is
    # nonzero; padded / out-of-range pixels contribute exactly 0.
    ce_ref[0] = valid * jnp.log(p2_lab + EPS)

    # Dice numerator partial for this tile: sum(p2 * onehot) over pixels.
    tot = jnp.sum(p2_lab, axis=1, keepdims=True)   # (RT, 1)
    tot = jnp.sum(tot, axis=0, keepdims=True)      # (1, 1)
    num_ref[0, 0] = jnp.broadcast_to(tot, (8, LANES))


def dice_topk(pred, ann, k=10):
    """pred: (B, C, H, W) float, ann: (B, H, W) int class labels. Returns (B,)."""
    B, C, H, W = pred.shape
    hw = H * W

    # ---- tiling: pixels -> (rows, 128), rows tiled in multiples of 8 ----
    rows = -(-hw // LANES)
    rows8 = -(-rows // 8) * 8
    # Size the tile so the ~ (3C + 10) live (RT, 128) f32 temporaries stay
    # well under v7x's 64 MiB VMEM (budget ~12 MiB), capped at 512 rows.
    budget = 12 * 1024 * 1024
    rt_budget = (budget // (LANES * 4 * (3 * C + 10)) // 8) * 8
    rt = max(8, min(512, rows8, rt_budget))
    pr = -(-rows8 // rt) * rt                  # padded rows (multiple of rt)
    nt = pr // rt
    pad_pix = pr * LANES

    predf = pred.reshape(B, C, hw)             # keep input dtype; upcast in-kernel
    annf = ann.reshape(B, hw).astype(jnp.int32)
    if pad_pix != hw:
        predf = jnp.pad(predf, ((0, 0), (0, 0), (0, pad_pix - hw)))
        annf = jnp.pad(annf, ((0, 0), (0, pad_pix - hw)), constant_values=-1)
    pred4 = predf.reshape(B, C, pr, LANES)
    ann3 = annf.reshape(B, pr, LANES)

    ce, num_part = pl.pallas_call(
        _dicetopk_kernel,
        out_shape=(
            jax.ShapeDtypeStruct((B, pr, LANES), jnp.float32),
            jax.ShapeDtypeStruct((B, nt, 8, LANES), jnp.float32),
        ),
        grid=(B, nt),
        in_specs=[
            pl.BlockSpec((1, C, rt, LANES), lambda b, t: (b, 0, t, 0)),
            pl.BlockSpec((1, rt, LANES), lambda b, t: (b, t, 0)),
        ],
        out_specs=(
            pl.BlockSpec((1, rt, LANES), lambda b, t: (b, t, 0)),
            pl.BlockSpec((1, 1, 8, LANES), lambda b, t: (b, t, 0, 0)),
        ),
        compiler_params=pltpu.CompilerParams(
            dimension_semantics=("parallel", "parallel"),
            vmem_limit_bytes=48 * 1024 * 1024,
        ),
    )(pred4, ann3)

    # ---- dice loss ----
    num = jnp.sum(num_part[:, :, 0, 0], axis=1)           # (B,) sum(p2 * onehot)
    # sum_c softmax == 1 per pixel and sum_c onehot == 1 per pixel, so
    # psum == osum == H*W analytically (labels assumed in [0, C)).
    hw_f = jnp.float32(hw)
    dice_loss = 1.0 - (2.0 * num) / (hw_f + hw_f + EPS)

    # ---- top-k (k% smallest of onehot*log(p2+eps) over the full B*C*H*W) ----
    # The compact (B, HW) array holds every nonzero (<= 0) entry of the full
    # tensor; the dropped entries are exact zeros, so the sum of the n
    # smallest is unchanged when selecting min(n, size) from the compact form.
    n = int(B * C * hw * k / 100)
    n = max(n, 1)                                          # guard tiny inputs (orig would div-by-0)
    ce_flat = ce.reshape(-1)
    n_sel = min(n, int(ce_flat.shape[0]))
    # TODO(synk): torch.topk(largest=False) has no clean single Pallas TPU
    # primitive; the k-smallest selection runs as jax.lax.top_k on the compact
    # per-pixel array in plain JAX glue.
    vals = jax.lax.top_k(-ce_flat, n_sel)[0]               # n_sel largest of -loss
    topk_loss = (1.0 / n) * jnp.sum(vals)                  # == -1/n * sum(n smallest)

    return dice_loss + topk_loss                           # (B,) + scalar -> (B,)


def _reference(pred, ann, k=10):
    """Pure-JAX reference mirroring the PyTorch module."""
    B, C, H, W = pred.shape
    p1 = jax.nn.softmax(pred, axis=1)
    p2 = jax.nn.softmax(p1, axis=1)
    onehot = jax.nn.one_hot(ann, C, axis=1, dtype=jnp.float32)    # (B, C, H, W)
    num = 2.0 * jnp.sum(p2 * onehot, axis=(1, 2, 3))
    denom = jnp.sum(onehot, axis=(1, 2, 3)) + jnp.sum(p2, axis=(1, 2, 3)) + EPS
    dice = 1.0 - num / denom
    loss = (onehot * jnp.log(p2 + EPS)).reshape(-1)
    n = int(loss.shape[0] * k / 100)
    smallest = -jax.lax.top_k(-loss, n)[0]
    topk = -1.0 / n * jnp.sum(smallest)
    return dice + topk


if __name__ == "__main__":
    key = jax.random.PRNGKey(0)
    kp, ka = jax.random.split(key)
    B, C, H, W = 2, 4, 16, 16
    pred = jax.random.normal(kp, (B, C, H, W), dtype=jnp.float32)
    ann = jax.random.randint(ka, (B, H, W), 0, C, dtype=jnp.int32)

    out = jax.block_until_ready(dice_topk(pred, ann, k=10))
    ref = jax.block_until_ready(_reference(pred, ann, k=10))

    assert out.shape == (B,), out.shape
    assert jnp.allclose(out, ref, atol=1e-5, rtol=1e-5), (out, ref)
    print("KERNEL_OK")
</pallas_src>

<mosaic_0001>
module attributes {stable_mosaic.version = 11 : i64} {
  func.func @_dicetopk_kernel(%arg0: i32, %arg1: i32, %arg2: memref<1x4x8x128xf32, #tpu.memory_space<vmem>>, %arg3: memref<1x8x128xi32, #tpu.memory_space<vmem>>, %arg4: memref<1x8x128xf32, #tpu.memory_space<vmem>>, %arg5: memref<1x1x8x128xf32, #tpu.memory_space<vmem>>) attributes {dimension_semantics = [#tpu.dimension_semantics<parallel>, #tpu.dimension_semantics<parallel>], iteration_bounds = array<i64: 2, 1>, scalar_prefetch = 0 : i64, scratch_operands = 0 : i64, tpu.core_type = #tpu.core_type<tc>, window_params = [{transform_indices = @transform_0, window_bounds = array<i64: 1, 4, 8, 128>}, {transform_indices = @transform_1, window_bounds = array<i64: 1, 8, 128>}, {transform_indices = @transform_2, window_bounds = array<i64: 1, 8, 128>}, {transform_indices = @transform_3, window_bounds = array<i64: 1, 1, 8, 128>}]} {
    %c0 = arith.constant 0 : index
    %c0_0 = arith.constant 0 : index
    %c0_1 = arith.constant 0 : index
    %c0_2 = arith.constant 0 : index
    %0 = vector.load %arg2[%c0, %c0_0, %c0_1, %c0_2] : memref<1x4x8x128xf32, #tpu.memory_space<vmem>>, vector<1x1x8x128xf32>
    %1 = vector.shape_cast %0 : vector<1x1x8x128xf32> to vector<8x128xf32>
    %c0_3 = arith.constant 0 : index
    %c1 = arith.constant 1 : index
    %c0_4 = arith.constant 0 : index
    %c0_5 = arith.constant 0 : index
    %2 = vector.load %arg2[%c0_3, %c1, %c0_4, %c0_5] : memref<1x4x8x128xf32, #tpu.memory_space<vmem>>, vector<1x1x8x128xf32>
    %3 = vector.shape_cast %2 : vector<1x1x8x128xf32> to vector<8x128xf32>
    %c0_6 = arith.constant 0 : index
    %c2 = arith.constant 2 : index
    %c0_7 = arith.constant 0 : index
    %c0_8 = arith.constant 0 : index
    %4 = vector.load %arg2[%c0_6, %c2, %c0_7, %c0_8] : memref<1x4x8x128xf32, #tpu.memory_space<vmem>>, vector<1x1x8x128xf32>
    %5 = vector.shape_cast %4 : vector<1x1x8x128xf32> to vector<8x128xf32>
    %c0_9 = arith.constant 0 : index
    %c3 = arith.constant 3 : index
    %c0_10 = arith.constant 0 : index
    %c0_11 = arith.constant 0 : index
    %6 = vector.load %arg2[%c0_9, %c3, %c0_10, %c0_11] : memref<1x4x8x128xf32, #tpu.memory_space<vmem>>, vector<1x1x8x128xf32>
    %7 = vector.shape_cast %6 : vector<1x1x8x128xf32> to vector<8x128xf32>
    %8 = arith.maximumf %1, %3 : vector<8x128xf32>
    %9 = arith.maximumf %8, %5 : vector<8x128xf32>
    %10 = arith.maximumf %9, %7 : vector<8x128xf32>
    %11 = arith.subf %1, %10 : vector<8x128xf32>
    %12 = math.exp %11 : vector<8x128xf32>
    %13 = arith.subf %3, %10 : vector<8x128xf32>
    %14 = math.exp %13 : vector<8x128xf32>
    %15 = arith.subf %5, %10 : vector<8x128xf32>
    %16 = math.exp %15 : vector<8x128xf32>
    %17 = arith.subf %7, %10 : vector<8x128xf32>
    %18 = math.exp %17 : vector<8x128xf32>
    %19 = arith.addf %12, %14 : vector<8x128xf32>
    %20 = arith.addf %19, %16 : vector<8x128xf32>
    %21 = arith.addf %20, %18 : vector<8x128xf32>
    %22 = tpu.reciprocal %21 : vector<8x128xf32> -> vector<8x128xf32>
    %23 = arith.mulf %12, %22 : vector<8x128xf32>
    %24 = arith.mulf %14, %22 : vector<8x128xf32>
    %25 = arith.mulf %16, %22 : vector<8x128xf32>
    %26 = arith.mulf %18, %22 : vector<8x128xf32>
    %27 = arith.maximumf %23, %24 : vector<8x128xf32>
    %28 = arith.maximumf %27, %25 : vector<8x128xf32>
    %29 = arith.maximumf %28, %26 : vector<8x128xf32>
    %30 = arith.subf %23, %29 : vector<8x128xf32>
    %31 = math.exp %30 : vector<8x128xf32>
    %32 = arith.subf %24, %29 : vector<8x128xf32>
    %33 = math.exp %32 : vector<8x128xf32>
    %34 = arith.subf %25, %29 : vector<8x128xf32>
    %35 = math.exp %34 : vector<8x128xf32>
    %36 = arith.subf %26, %29 : vector<8x128xf32>
    %37 = math.exp %36 : vector<8x128xf32>
    %38 = arith.addf %31, %33 : vector<8x128xf32>
    %39 = arith.addf %38, %35 : vector<8x128xf32>
    %40 = arith.addf %39, %37 : vector<8x128xf32>
    %c0_12 = arith.constant 0 : index
    %c0_13 = arith.constant 0 : index
    %c0_14 = arith.constant 0 : index
    %41 = vector.load %arg3[%c0_12, %c0_13, %c0_14] : memref<1x8x128xi32, #tpu.memory_space<vmem>>, vector<1x8x128xi32>
    %42 = vector.shape_cast %41 : vector<1x8x128xi32> to vector<8x128xi32>
    %cst = arith.constant 0.000000e+00 : f32
    %43 = vector.broadcast %cst : f32 to vector<8x128xf32>
    %c0_i32 = arith.constant 0 : i32
    %44 = vector.broadcast %c0_i32 : i32 to vector<8x128xi32>
    %45 = arith.cmpi eq, %42, %44 : vector<8x128xi32>
    %46 = arith.select %45, %31, %43 : vector<8x128xi1>, vector<8x128xf32>
    %cst_15 = arith.constant 1.000000e+00 : f32
    %47 = vector.broadcast %cst_15 : f32 to vector<8x128xf32>
    %48 = arith.select %45, %47, %43 : vector<8x128xi1>, vector<8x128xf32>
    %c1_i32 = arith.constant 1 : i32
    %49 = vector.broadcast %c1_i32 : i32 to vector<8x128xi32>
    %50 = arith.cmpi eq, %42, %49 : vector<8x128xi32>
    %51 = arith.select %50, %33, %46 : vector<8x128xi1>, vector<8x128xf32>
    %cst_16 = arith.constant 1.000000e+00 : f32
    %52 = vector.broadcast %cst_16 : f32 to vector<8x128xf32>
    %53 = arith.select %50, %52, %48 : vector<8x128xi1>, vector<8x128xf32>
    %c2_i32 = arith.constant 2 : i32
    %54 = vector.broadcast %c2_i32 : i32 to vector<8x128xi32>
    %55 = arith.cmpi eq, %42, %54 : vector<8x128xi32>
    %56 = arith.select %55, %35, %51 : vector<8x128xi1>, vector<8x128xf32>
    %cst_17 = arith.constant 1.000000e+00 : f32
    %57 = vector.broadcast %cst_17 : f32 to vector<8x128xf32>
    %58 = arith.select %55, %57, %53 : vector<8x128xi1>, vector<8x128xf32>
    %c3_i32 = arith.constant 3 : i32
    %59 = vector.broadcast %c3_i32 : i32 to vector<8x128xi32>
    %60 = arith.cmpi eq, %42, %59 : vector<8x128xi32>
    %61 = arith.select %60, %37, %56 : vector<8x128xi1>, vector<8x128xf32>
    %cst_18 = arith.constant 1.000000e+00 : f32
    %62 = vector.broadcast %cst_18 : f32 to vector<8x128xf32>
    %63 = arith.select %60, %62, %58 : vector<8x128xi1>, vector<8x128xf32>
    %64 = tpu.reciprocal %40 : vector<8x128xf32> -> vector<8x128xf32>
    %65 = arith.mulf %61, %64 : vector<8x128xf32>
    %cst_19 = arith.constant 1.000000e-10 : f32
    %66 = vector.broadcast %cst_19 : f32 to vector<8x128xf32>
    %67 = arith.addf %65, %66 : vector<8x128xf32>
    %68 = math.log %67 : vector<8x128xf32>
    %69 = arith.mulf %63, %68 : vector<8x128xf32>
    %c0_20 = arith.constant 0 : index
    %c0_21 = arith.constant 0 : index
    %c0_22 = arith.constant 0 : index
    %70 = vector.load %arg4[%c0_20, %c0_21, %c0_22] : memref<1x8x128xf32, #tpu.memory_space<vmem>>, vector<1x8x128xf32>
    %71 = vector.shape_cast %70 : vector<1x8x128xf32> to vector<8x128xf32>
    %72 = vector.shape_cast %69 : vector<8x128xf32> to vector<1x8x128xf32>
    tpu.vector_store %arg4[%c0_20, %c0_21, %c0_22], %72 {strides = array<i32>} : memref<1x8x128xf32, #tpu.memory_space<vmem>>, vector<1x8x128xf32>,
    %cst_23 = arith.constant dense<0.000000e+00> : vector<8xf32>
    %73 = vector.multi_reduction <add>, %65, %cst_23 [1] : vector<8x128xf32> to vector<8xf32>
    %74 = vector.shape_cast %73 : vector<8xf32> to vector<8x1xf32>
    %cst_24 = arith.constant dense<0.000000e+00> : vector<1xf32>
    %75 = vector.multi_reduction <add>, %74, %cst_24 [0] : vector<8x1xf32> to vector<1xf32>
    %76 = vector.shape_cast %75 : vector<1xf32> to vector<1x1xf32>
    %77 = vector.shape_cast %76 : vector<1x1xf32> to vector<1x1xf32>
    %78 = vector.broadcast %77 : vector<1x1xf32> to vector<8x128xf32>
    %c0_25 = arith.constant 0 : index
    %c0_26 = arith.constant 0 : index
    %c0_27 = arith.constant 0 : index
    %c0_28 = arith.constant 0 : index
    %79 = vector.load %arg5[%c0_25, %c0_26, %c0_27, %c0_28] : memref<1x1x8x128xf32, #tpu.memory_space<vmem>>, vector<1x1x8x128xf32>
    %80 = vector.shape_cast %79 : vector<1x1x8x128xf32> to vector<8x128xf32>
    %81 = vector.shape_cast %78 : vector<8x128xf32> to vector<1x1x8x128xf32>
    tpu.vector_store %arg5[%c0_25, %c0_26, %c0_27, %c0_28], %81 {strides = array<i32>} : memref<1x1x8x128xf32, #tpu.memory_space<vmem>>, vector<1x1x8x128xf32>,
    return
  }
  func.func @transform_0(%arg0: i32, %arg1: i32) -> (i32, i32, i32, i32) {
    %c0_i32 = arith.constant 0 : i32
    %c0_i32_0 = arith.constant 0 : i32
    %c0_i32_1 = arith.constant 0 : i32
    return %arg0, %c0_i32, %arg1, %c0_i32_0 : i32, i32, i32, i32
  }
  func.func @transform_1(%arg0: i32, %arg1: i32) -> (i32, i32, i32) {
    %c0_i32 = arith.constant 0 : i32
    %c0_i32_0 = arith.constant 0 : i32
    return %arg0, %arg1, %c0_i32 : i32, i32, i32
  }
  func.func @transform_2(%arg0: i32, %arg1: i32) -> (i32, i32, i32) {
    %c0_i32 = arith.constant 0 : i32
    %c0_i32_0 = arith.constant 0 : i32
    return %arg0, %arg1, %c0_i32 : i32, i32, i32
  }
  func.func @transform_3(%arg0: i32, %arg1: i32) -> (i32, i32, i32, i32) {
    %c0_i32 = arith.constant 0 : i32
    %c0_i32_0 = arith.constant 0 : i32
    %c0_i32_1 = arith.constant 0 : i32
    return %arg0, %arg1, %c0_i32, %c0_i32_0 : i32, i32, i32, i32
  }
}

</mosaic_0001>

<llo_original>
// kernel: tpu_custom_call.1
$region0: #{tpu_custom_call.1}
  #allocation0 [shape = 'u32[]', space=smem, size = 0x4, offset = 0x4, fixed_abs, tag = 'smem constant byte address 0x4 - core index']
  #allocation1 [shape = 'u32[144,128]{1,0:T(1,128)}', space=vmem, size = 0x12000, scoped, tag = 'internal scratch']
  %s0 = inlined_call_operand.hbm [shape: f32[2,4,8,128], index: 0, kind: input, shape index: {}]
  %s1 = inlined_call_operand.hbm [shape: s32[2,8,128], index: 1, kind: input, shape index: {}]
  %s2 = inlined_call_operand.hbm [shape: f32[2,8,128], index: 2, kind: output, shape index: {0}]
  %s3 = inlined_call_operand.hbm [shape: f32[2,1,8,128], index: 3, kind: output, shape index: {1}]
  %4 = xla_tuple %s2, %s3
  %s5 = sld [smem:[#allocation0]]
  $region57: #{tpu_custom_call.1} parent=0
    _
  %s7 = ssub.s32 1, %s5
  %s8 = scalar_select 0, %s7, %s5
  $region1: #{tpu_custom_call.1} parent=0
    #allocation2 [shape = 'u8[32768]{0}', space=vmem, size = 0x8000, scoped, tag = 'input window, operand 0']
    #allocation3 [shape = 's32[2]{0}', space=sflag, size = 0x8, scoped, tag = 'scoped memory for tpu_custom_call.1']
    #allocation4 [shape = 's32[2]{0}', space=sflag, size = 0x8, scoped, tag = 'scoped memory for tpu_custom_call.1']
    #allocation5 [shape = 'u8[8192]{0}', space=vmem, size = 0x2000, scoped, tag = 'input window, operand 1']
    #allocation6 [shape = 's32[2]{0}', space=sflag, size = 0x8, scoped, tag = 'scoped memory for tpu_custom_call.1']
    #allocation7 [shape = 'u8[8192]{0}', space=vmem, size = 0x2000, scoped, tag = 'output window, operand 0']
    #allocation8 [shape = 'u8[8192]{0}', space=vmem, size = 0x2000, scoped, tag = 'output window, operand 1']
    #allocation9 [shape = 's32[2]{0}', space=sflag, size = 0x8, scoped, tag = 'scoped memory for tpu_custom_call.1']
    %9 = vsyncpa [#allocation3], 0
    %s10 = scalar_lea.sflag [#allocation3], 1
    %11 = vsyncpa %s10, 0
    %12 = vsyncpa [#allocation6], 0
    %s13 = scalar_lea.sflag [#allocation6], 1
    %14 = vsyncpa %s13, 0
    %15 = vsyncpa [#allocation4], 0
    %s16 = scalar_lea.sflag [#allocation4], 1
    %17 = vsyncpa %s16, 0
    %18 = vsyncpa [#allocation9], 0
    %s19 = scalar_lea.sflag [#allocation9], 1
    %20 = vsyncpa %s19, 0
    loop: start=0, step=1, limit=4
    $region2: #{tpu_custom_call.1} parent=1 // loop_pre_header
      _
    $region3: #{tpu_custom_call.1} parent=1 // loop_header
      %s22 = sphi 0, %s26
      %p23 = scmp.ge.s32.totalorder %s22, 4
      %s29 = sphi 0, %s41
      %s30 = sphi 0, %s37
      %s31 = sphi 0, %s29
      %s32 = sphi 0, %s30
      %s33 = sphi 0, %s31
      %s34 = sphi 0, %s32
      %s46 = sphi 0, %s48
      %s49 = sphi 0, %s46
      %s50 = sphi 0, %s49
      %s66 = sphi 0, %s50
      %s74 = sphi 0, %s76
      %s77 = sphi 0, %s74
      %s78 = sphi 0, %s77
      %s94 = sphi 0, %s78
      %s102 = sphi 0, %s104
      %s105 = sphi 0, %s102
      %s106 = sphi 0, %s105
      %s122 = sphi 0, %s106
      %s130 = sphi 0, %s132
      %s133 = sphi 0, %s130
      %s134 = sphi 0, %s133
      %s150 = sphi 0, %s134
    $region4: #{tpu_custom_call.1} parent=1 // loop_header_branch
      %25 = sbr.rel (%p23) target = $region8
    $region5: #{tpu_custom_call.1} parent=1 // loop_body
      %s27 = ssub.s32 %s22, 1
      %s28 = ssub.s32 %s22, 2
      %s35 = sadd.s32 1, %s30
      %p36 = scmp.ge.s32.totalorder %s35, 1
      %s37 = scalar_select %p36, 0, %s35
      %s38 = sadd.s32 1, %s29
      %s39 = scalar_select %p36, %s38, %s29
      %p40 = scmp.ge.s32.totalorder %s39, 2
      %s41 = scalar_select %p40, 0, %s39
      %s42 = ssub.s32 %s29, %s41
      %s43 = ssub.s32 %s30, %s37
      %s44 = sor.u32 %s42, %s43
      %p45 = scmp.eq.s32.totalorder %s44, 0
      %s47 = sadd.s32 %s46, 1
      %s48 = scalar_select %p45, %s46, %s47
      %p51 = pneg %p45
      %p52 = scmp.eq.s32.totalorder %s22, 1
      %p53 = por %p51, %p52
      %p54 = scmp.ne.s32.totalorder %s46, %s49
      %p55 = scmp.eq.s32.totalorder %s22, 0
      %p56 = por %p54, %p55
      %p57 = scmp.ne.s32.totalorder %s46, %s49
      %p58 = scmp.eq.s32.totalorder %s27, 1
      %p59 = por %p57, %p58
      %p60 = scmp.ne.s32.totalorder %s49, %s50
      %p61 = scmp.eq.s32.totalorder %s27, 0
      %p62 = por %p60, %p61
      %p63 = scmp.ne.s32.totalorder %s49, %s50
      %p64 = scmp.eq.s32.totalorder %s28, 1
      %p65 = por %p63, %p64
      %p67 = scmp.ne.s32.totalorder %s50, %s66
      %p68 = scmp.eq.s32.totalorder %s28, 0
      %p69 = por %p67, %p68
      %s70 = ssub.s32 %s29, %s41
      %s71 = ssub.s32 %s30, %s37
      %s72 = sor.u32 %s70, %s71
      %p73 = scmp.eq.s32.totalorder %s72, 0
      %s75 = sadd.s32 %s74, 1
      %s76 = scalar_select %p73, %s74, %s75
      %p79 = pneg %p73
      %p80 = scmp.eq.s32.totalorder %s22, 1
      %p81 = por %p79, %p80
      %p82 = scmp.ne.s32.totalorder %s74, %s77
      %p83 = scmp.eq.s32.totalorder %s22, 0
      %p84 = por %p82, %p83
      %p85 = scmp.ne.s32.totalorder %s74, %s77
      %p86 = scmp.eq.s32.totalorder %s27, 1
      %p87 = por %p85, %p86
      %p88 = scmp.ne.s32.totalorder %s77, %s78
      %p89 = scmp.eq.s32.totalorder %s27, 0
      %p90 = por %p88, %p89
      %p91 = scmp.ne.s32.totalorder %s77, %s78
      %p92 = scmp.eq.s32.totalorder %s28, 1
      %p93 = por %p91, %p92
      %p95 = scmp.ne.s32.totalorder %s78, %s94
      %p96 = scmp.eq.s32.totalorder %s28, 0
      %p97 = por %p95, %p96
      %s98 = ssub.s32 %s29, %s41
      %s99 = ssub.s32 %s30, %s37
      %s100 = sor.u32 %s98, %s99
      %p101 = scmp.eq.s32.totalorder %s100, 0
      %s103 = sadd.s32 %s102, 1
      %s104 = scalar_select %p101, %s102, %s103
      %p107 = pneg %p101
      %p108 = scmp.eq.s32.totalorder %s22, 1
      %p109 = por %p107, %p108
      %p110 = scmp.ne.s32.totalorder %s102, %s105
      %p111 = scmp.eq.s32.totalorder %s22, 0
      %p112 = por %p110, %p111
      %p113 = scmp.ne.s32.totalorder %s102, %s105
      %p114 = scmp.eq.s32.totalorder %s27, 1
      %p115 = por %p113, %p114
      %p116 = scmp.ne.s32.totalorder %s105, %s106
      %p117 = scmp.eq.s32.totalorder %s27, 0
      %p118 = por %p116, %p117
      %p119 = scmp.ne.s32.totalorder %s105, %s106
      %p120 = scmp.eq.s32.totalorder %s28, 1
      %p121 = por %p119, %p120
      %p123 = scmp.ne.s32.totalorder %s106, %s122
      %p124 = scmp.eq.s32.totalorder %s28, 0
      %p125 = por %p123, %p124
      %s126 = ssub.s32 %s29, %s41
      %s127 = ssub.s32 %s30, %s37
      %s128 = sor.u32 %s126, %s127
      %p129 = scmp.eq.s32.totalorder %s128, 0
      %s131 = sadd.s32 %s130, 1
      %s132 = scalar_select %p129, %s130, %s131
      %p135 = pneg %p129
      %p136 = scmp.eq.s32.totalorder %s22, 1
      %p137 = por %p135, %p136
      %p138 = scmp.ne.s32.totalorder %s130, %s133
      %p139 = scmp.eq.s32.totalorder %s22, 0
      %p140 = por %p138, %p139
      %p141 = scmp.ne.s32.totalorder %s130, %s133
      %p142 = scmp.eq.s32.totalorder %s27, 1
      %p143 = por %p141, %p142
      %p144 = scmp.ne.s32.totalorder %s133, %s134
      %p145 = scmp.eq.s32.totalorder %s27, 0
      %p146 = por %p144, %p145
      %p147 = scmp.ne.s32.totalorder %s133, %s134
      %p148 = scmp.eq.s32.totalorder %s28, 1
      %p149 = por %p147, %p148
      %p151 = scmp.ne.s32.totalorder %s134, %s150
      %p152 = scmp.eq.s32.totalorder %s28, 0
      %p153 = por %p151, %p152
      %p154 = scmp.le.s32.totalorder 1, %s22
      %p155 = scmp.lt.s32.totalorder %s22, 3
      %p156 = pnand %p154, %p155
      %p157 = pneg %p156
      // Predicated region
      $region9: #{tpu_custom_call.1} parent=5 // pred_check
        _
      $region10: #{tpu_custom_call.1} parent=5 // pred_check_branch
        %159 = sbr.rel (%p156) target = $region12
      $region11: #{tpu_custom_call.1} parent=5 // pred_region
        %s160 = ssub.s32 %s22, 1
      $region12: #{tpu_custom_call.1} parent=5 // pred_fallthru
        _
      %p161 = scmp.lt.s32.totalorder %s22, 2
      // Predicated region
      $region13: #{tpu_custom_call.1} parent=5 // pred_check
        %p162 = pneg %p161
      $region14: #{tpu_custom_call.1} parent=5 // pred_check_branch
        %164 = sbr.rel (%p162) target = $region16
      $region15: #{tpu_custom_call.1} parent=5 // pred_region
        // Predicated region
        $region17: #{tpu_custom_call.1} parent=15 // pred_check
          %p165 = pneg %p56
        $region18: #{tpu_custom_call.1} parent=15 // pred_check_branch
          %167 = sbr.rel (%p165) target = $region20
        $region19: #{tpu_custom_call.1} parent=15 // pred_region
          %s168 = sand.u32 %s46, 1
          %s169 = scalar_lea.sflag [#allocation3], %s168
          %s170 = sand.u32 %s46, 1
          %s171 = smul.addr %s170, 32
          %s172 = scalar_lea.vmem [#allocation2], %s171
          %s174 = ssub.s32 512, 512
          %175 = vsyncadd %s169, %s174
          %s176 = smul.addr %s29, 4
          %s177 = sadd.s32 %s30, %s176
          %s178 = smul.addr %s177, 128
          %s179 = scalar_lea.hbm %s0, %s178
          %s180 = sshll.u32 %s172, 4
          %s181 = int_to_ptr.vmem [resolvable:$true] %s180
          %186 = dma.hbm_to_vmem [thread:$0]  %s179, 512, %s181, %s169, 128, 128, 8
        $region20: #{tpu_custom_call.1} parent=15 // pred_fallthru
          _
        // Predicated region
        $region21: #{tpu_custom_call.1} parent=15 // pred_check
          %p187 = pneg %p84
        $region22: #{tpu_custom_call.1} parent=15 // pred_check_branch
          %189 = sbr.rel (%p187) target = $region24
        $region23: #{tpu_custom_call.1} parent=15 // pred_region
          %s190 = sand.u32 %s74, 1
          %s191 = scalar_lea.sflag [#allocation6], %s190
          %s192 = sand.u32 %s74, 1
          %s193 = smul.addr %s192, 8
          %s194 = scalar_lea.vmem [#allocation5], %s193
          %s196 = ssub.s32 128, 128
          %197 = vsyncadd %s191, %s196
          %s198 = sadd.s32 %s30, %s29
          %s199 = smul.addr %s198, 128
          %s200 = scalar_lea.hbm %s1, %s199
          %s202 = sshll.u32 %s194, 4
          %s203 = int_to_ptr.vmem [resolvable:$true] %s202
          %205 = dma.hbm_to_vmem [thread:$0]  %s200, 128, %s203, %s191
        $region24: #{tpu_custom_call.1} parent=15 // pred_fallthru
          _
      $region16: #{tpu_custom_call.1} parent=5 // pred_fallthru
        _
      %p206 = scmp.le.s32.totalorder 1, %s22
      %p207 = scmp.lt.s32.totalorder %s22, 3
      %p208 = pnand %p206, %p207
      %p209 = pneg %p208
      // Predicated region
      $region25: #{tpu_custom_call.1} parent=5 // pred_check
        _
      $region26: #{tpu_custom_call.1} parent=5 // pred_check_branch
        %211 = sbr.rel (%p208) target = $region28
      $region27: #{tpu_custom_call.1} parent=5 // pred_region
        %s212 = ssub.s32 %s22, 1
        %s213 = sand.u32 %s49, 1
        %s214 = scalar_lea.sflag [#allocation3], %s213
        %s215 = sand.u32 %s49, 1
        %s216 = smul.addr %s215, 32
        %s217 = scalar_lea.vmem [#allocation2], %s216
        // Predicated region
        $region29: #{tpu_custom_call.1} parent=27 // pred_check
          %p218 = pneg %p62
        $region30: #{tpu_custom_call.1} parent=27 // pred_check_branch
          %220 = sbr.rel (%p218) target = $region32
        $region31: #{tpu_custom_call.1} parent=27 // pred_region
          %221 = dma.done %s214, 512
        $region32: #{tpu_custom_call.1} parent=27 // pred_fallthru
          _
        %s222 = sand.u32 %s77, 1
        %s223 = scalar_lea.sflag [#allocation6], %s222
        %s224 = sand.u32 %s77, 1
        %s225 = smul.addr %s224, 8
        %s226 = scalar_lea.vmem [#allocation5], %s225
        // Predicated region
        $region33: #{tpu_custom_call.1} parent=27 // pred_check
          %p227 = pneg %p90
        $region34: #{tpu_custom_call.1} parent=27 // pred_check_branch
          %229 = sbr.rel (%p227) target = $region36
        $region35: #{tpu_custom_call.1} parent=27 // pred_region
          %230 = dma.done %s223, 128
        $region36: #{tpu_custom_call.1} parent=27 // pred_fallthru
          _
        %s231 = sand.u32 %s49, 1
        %s232 = scalar_lea.sflag [#allocation3], %s231
        %s233 = sand.u32 %s49, 1
        %s234 = smul.addr %s233, 32
        %s235 = scalar_lea.vmem [#allocation2], %s234
        %p236 = pneg %p62
        %p237 = pneg %p59
        %s238 = sand.u32 %s77, 1
        %s239 = scalar_lea.sflag [#allocation6], %s238
        %s240 = sand.u32 %s77, 1
        %s241 = smul.addr %s240, 8
        %s242 = scalar_lea.vmem [#allocation5], %s241
        %p243 = pneg %p90
        %p244 = pneg %p87
        %p245 = pneg %p118
        %p246 = pneg %p115
        %s247 = sand.u32 %s105, 1
        %s248 = scalar_lea.sflag [#allocation4], %s247
        %s249 = sand.u32 %s105, 1
        %s250 = smul.addr %s249, 8
        %s251 = scalar_lea.vmem [#allocation7], %s250
        %p252 = pneg %p146
        %p253 = pneg %p143
        %s254 = sand.u32 %s133, 1
        %s255 = scalar_lea.sflag [#allocation9], %s254
        %s256 = sand.u32 %s133, 1
        %s257 = smul.addr %s256, 8
        %s258 = scalar_lea.vmem [#allocation8], %s257
        %v259 = vld [vmem:[%s217] sm:$0xff]
        %s260 = scalar_lea.vmem %s217, 8 [#allocation2]
        %v261 = vld [vmem:[%s260] sm:$0xff]
        %s262 = scalar_lea.vmem %s217, 16 [#allocation2]
        %v263 = vld [vmem:[%s262] sm:$0xff]
        %s264 = scalar_lea.vmem %s217, 24 [#allocation2]
        %v265 = vld [vmem:[%s264] sm:$0xff]
        %v266 = vmax.f32 %v259, %v261
        %v267 = vmax.f32 %v266, %v263
        %v268 = vmax.f32 %v267, %v265
        %v269 = vsub.f32 %v259, %v268
        %v270 = vmul.f32 %v269, 1.442695
        %v271 = vpow.pop %v270
        %v272 = vsub.f32 %v261, %v268
        %v273 = vmul.f32 %v272, 1.442695
        %v274 = vpow.pop %v273
        %v275 = vsub.f32 %v263, %v268
        %v276 = vmul.f32 %v275, 1.442695
        %v277 = vpow.pop %v276
        %v278 = vsub.f32 %v265, %v268
        %v279 = vmul.f32 %v278, 1.442695
        %v280 = vpow.pop %v279
        %v281 = vadd.f32 %v271, %v274
        %v282 = vadd.f32 %v281, %v277
        %v283 = vadd.f32 %v282, %v280
        %v284 = vrcp.pop %v283
        %v285 = vmul.f32 %v271, %v284
        %v286 = vmul.f32 %v274, %v284
        %v287 = vmul.f32 %v277, %v284
        %v288 = vmul.f32 %v280, %v284
        %v289 = vmax.f32 %v285, %v286
        %v290 = vmax.f32 %v289, %v287
        %v291 = vmax.f32 %v290, %v288
        %v292 = vsub.f32 %v285, %v291
        %v293 = vmul.f32 %v292, 1.442695
        %v294 = vpow.pop %v293
        %v295 = vsub.f32 %v286, %v291
        %v296 = vmul.f32 %v295, 1.442695
        %v297 = vpow.pop %v296
        %v298 = vsub.f32 %v287, %v291
        %v299 = vmul.f32 %v298, 1.442695
        %v300 = vpow.pop %v299
        %v301 = vsub.f32 %v288, %v291
        %v302 = vmul.f32 %v301, 1.442695
        %v303 = vpow.pop %v302
        %v304 = vadd.f32 %v294, %v297
        %v305 = vadd.f32 %v304, %v300
        %v306 = vadd.f32 %v305, %v303
        %v307 = vld [vmem:[%s226] sm:$0xff]
        %vm308 = vcmp.eq.s32.totalorder %v307, 0
        %v309 = vsel %vm308, %v294, 0.0
        %v310 = vsel %vm308, 1.0, 0.0
        %vm311 = vcmp.eq.s32.totalorder %v307, 1
        %v312 = vsel %vm311, %v297, %v309
        %v313 = vsel %vm311, 1.0, %v310
        %vm314 = vcmp.eq.s32.totalorder %v307, 2
        %v315 = vsel %vm314, %v300, %v312
        %v316 = vsel %vm314, 1.0, %v313
        %vm317 = vcmp.eq.s32.totalorder %v307, 3
        %v318 = vsel %vm317, %v303, %v315
        %v319 = vsel %vm317, 1.0, %v316
        %v320 = vrcp.pop %v306
        %v321 = vmul.f32 %v318, %v320
        %v322 = vadd.f32 %v321, 1e-10
        %v323 = vlog2.pop %v322
        %v324 = vmul.f32 %v323, 0.6931472
        %v325 = vmul.f32 %v319, %v324
        %326 = vst [vmem:[%s251] sm:$0xff] %v325
        %327 = vadd.xlane.f32.xlu0 %v321
        %v328 = vpop.xlane.xlu0 %327
        %v329 = vrot.slane %v328, 4
        %v330 = vadd.f32 %v328, %v329
        %v331 = vrot.slane %v330, 2
        %v332 = vadd.f32 %v330, %v331
        %v333 = vrot.slane %v332, 1
        %v334 = vadd.f32 %v332, %v333
        %335 = vst [vmem:[%s258] sm:$0xff] %v334
        %s336 = sand.u32 %s105, 1
        %s337 = scalar_lea.sflag [#allocation4], %s336
        %s338 = sand.u32 %s105, 1
        %s339 = smul.addr %s338, 8
        %s340 = scalar_lea.vmem [#allocation7], %s339
        %s341 = sand.u32 %s133, 1
        %s342 = scalar_lea.sflag [#allocation9], %s341
        %s343 = sand.u32 %s133, 1
        %s344 = smul.addr %s343, 8
        %s345 = scalar_lea.vmem [#allocation8], %s344
        // Predicated region
        $region37: #{tpu_custom_call.1} parent=27 // pred_check
          %p346 = pneg %p115
        $region38: #{tpu_custom_call.1} parent=27 // pred_check_branch
          %348 = sbr.rel (%p346) target = $region40
        $region39: #{tpu_custom_call.1} parent=27 // pred_region
          %s350 = ssub.s32 128, 128
          %351 = vsyncadd %s337, %s350
          %s352 = sadd.s32 %s32, %s31
          %s353 = smul.addr %s352, 128
          %s354 = scalar_lea.hbm %s2, %s353
          %s356 = sshll.u32 %s340, 4
          %s357 = int_to_ptr.vmem [resolvable:$true] %s356
          %359 = dma.vmem_to_hbm [thread:$0]  %s357, 128, %s354, %s337
        $region40: #{tpu_custom_call.1} parent=27 // pred_fallthru
          _
        // Predicated region
        $region41: #{tpu_custom_call.1} parent=27 // pred_check
          %p360 = pneg %p143
        $region42: #{tpu_custom_call.1} parent=27 // pred_check_branch
          %362 = sbr.rel (%p360) target = $region44
        $region43: #{tpu_custom_call.1} parent=27 // pred_region
          %s364 = ssub.s32 128, 128
          %365 = vsyncadd %s342, %s364
          %s366 = sadd.s32 %s32, %s31
          %s367 = smul.addr %s366, 128
          %s368 = scalar_lea.hbm %s3, %s367
          %s370 = sshll.u32 %s345, 4
          %s371 = int_to_ptr.vmem [resolvable:$true] %s370
          %373 = dma.vmem_to_hbm [thread:$0]  %s371, 128, %s368, %s342
        $region44: #{tpu_custom_call.1} parent=27 // pred_fallthru
          _
      $region28: #{tpu_custom_call.1} parent=5 // pred_fallthru
        _
      %p374 = scmp.le.s32.totalorder 2, %s22
      // Predicated region
      $region45: #{tpu_custom_call.1} parent=5 // pred_check
        %p375 = pneg %p374
      $region46: #{tpu_custom_call.1} parent=5 // pred_check_branch
        %377 = sbr.rel (%p375) target = $region48
      $region47: #{tpu_custom_call.1} parent=5 // pred_region
        %s378 = ssub.s32 %s22, 2
        // Predicated region
        $region49: #{tpu_custom_call.1} parent=47 // pred_check
          %p379 = pneg %p121
        $region50: #{tpu_custom_call.1} parent=47 // pred_check_branch
          %381 = sbr.rel (%p379) target = $region52
        $region51: #{tpu_custom_call.1} parent=47 // pred_region
          %s382 = sand.u32 %s106, 1
          %s383 = scalar_lea.sflag [#allocation4], %s382
          %s384 = sand.u32 %s106, 1
          %s385 = smul.addr %s384, 8
          %s386 = scalar_lea.vmem [#allocation7], %s385
          %387 = dma.done %s383, 128
        $region52: #{tpu_custom_call.1} parent=47 // pred_fallthru
          _
        // Predicated region
        $region53: #{tpu_custom_call.1} parent=47 // pred_check
          %p388 = pneg %p149
        $region54: #{tpu_custom_call.1} parent=47 // pred_check_branch
          %390 = sbr.rel (%p388) target = $region56
        $region55: #{tpu_custom_call.1} parent=47 // pred_region
          %s391 = sand.u32 %s134, 1
          %s392 = scalar_lea.sflag [#allocation9], %s391
          %s393 = sand.u32 %s134, 1
          %s394 = smul.addr %s393, 8
          %s395 = scalar_lea.vmem [#allocation8], %s394
          %396 = dma.done %s392, 128
        $region56: #{tpu_custom_call.1} parent=47 // pred_fallthru
          _
      $region48: #{tpu_custom_call.1} parent=5 // pred_fallthru
        _
    $region6: #{tpu_custom_call.1} parent=1 // loop_footer
      %s26 = sadd.s32 1, %s22
    $region7: #{tpu_custom_call.1} parent=1 // loop_footer_branch
      %21 = sbr.rel target = $region3
    $region8: #{tpu_custom_call.1} parent=1 // loop_exit
      _
    %397 = vsyncpa [#allocation3], 1
    %s398 = scalar_lea.sflag [#allocation3], 1
    %399 = vsyncpa %s398, 1
    %400 = vsyncpa [#allocation6], 1
    %s401 = scalar_lea.sflag [#allocation6], 1
    %402 = vsyncpa %s401, 1
    %403 = vsyncpa [#allocation4], 1
    %s404 = scalar_lea.sflag [#allocation4], 1
    %405 = vsyncpa %s404, 1
    %406 = vsyncpa [#allocation9], 1
    %s407 = scalar_lea.sflag [#allocation9], 1
    %408 = vsyncpa %s407, 1

</llo_original>
